<compile_context>
chip_gen: v5e
topology: v5e:2x2
jax: 0.10.0
libtpu: 0.0.40
codegen_flags: <defaults>
</compile_context>

<pallas_src>
import jax
import jax.numpy as jnp
from jax.experimental import pallas as pl
from jax.experimental.pallas import tpu as pltpu


# ---------------------------------------------------------------------------
# Kernel
# ---------------------------------------------------------------------------
def neucf_kernel(
    ue_ref, ie_ref,                 # (TB, D) f32, (TB, D) f32
    w1u_ref, w1i_ref, t1_ref,       # (D,256) bf16, (D,256) bf16, (1,256) f32
    w2_ref, t2_ref,                 # (256,128) bf16, (1,128) f32
    w3_ref, t3_ref,                 # (128,64) bf16, (1,64) f32
    wog_ref, w4o_ref, c_ref,        # (1,D) f32, (1,64) f32, (1,1) f32
    out_ref,                        # (TB, 1) f32
):
    ue = ue_ref[...]
    ie = ie_ref[...]

    # GMF branch (kept in f32 on the VPU).
    gmf = ue * ie

    # MLP layer 1: concat replaced by two split matmuls; bias+BN pre-folded.
    h = jnp.dot(ue.astype(jnp.bfloat16), w1u_ref[...],
                preferred_element_type=jnp.float32)
    h = h + jnp.dot(ie.astype(jnp.bfloat16), w1i_ref[...],
                    preferred_element_type=jnp.float32)
    h = jnp.maximum(h + t1_ref[...], 0.0)

    # MLP layer 2.
    h = jnp.dot(h.astype(jnp.bfloat16), w2_ref[...],
                preferred_element_type=jnp.float32)
    h = jnp.maximum(h + t2_ref[...], 0.0)

    # MLP layer 3.
    h = jnp.dot(h.astype(jnp.bfloat16), w3_ref[...],
                preferred_element_type=jnp.float32)
    h = jnp.maximum(h + t3_ref[...], 0.0)          # (TB, 64) f32

    # Layer 4 + Dropout(eval) + output Linear, algebraically folded into the
    # head:  logit = gmf @ wo[:D] + h3 @ (W4 @ wo[D:]) + (b4 @ wo[D:] + bo).
    # Implemented as VPU multiplies + XLU lane reductions (no N=1 MXU matmul).
    logit = (jnp.sum(gmf * wog_ref[...], axis=-1, keepdims=True)
             + jnp.sum(h * w4o_ref[...], axis=-1, keepdims=True)
             + c_ref[...])                          # (TB, 1) f32

    # sigmoid: exp -> EUP, approx reciprocal -> EUP.
    out_ref[...] = pl.reciprocal(1.0 + jnp.exp(-logit), approx=True)


# ---------------------------------------------------------------------------
# Wrapper
# ---------------------------------------------------------------------------
def neucf_forward(user_embed, item_embed, params, *, tb=128):
    """user_embed, item_embed: (B, D) float32. params: folded kernel params."""
    B, D = user_embed.shape
    n_tiles = pl.cdiv(B, tb)
    Bp = n_tiles * tb
    if Bp != B:
        pad = ((0, Bp - B), (0, 0))
        user_embed = jnp.pad(user_embed, pad)
        item_embed = jnp.pad(item_embed, pad)

    tile2 = lambda i: (i, 0)     # per-batch-tile blocks
    const2 = lambda i: (0, 0)    # VMEM-resident weights (same block every step)

    in_specs = [
        pl.BlockSpec((tb, D), tile2),                    # ue
        pl.BlockSpec((tb, D), tile2),                    # ie
        pl.BlockSpec(params["w1u"].shape, const2),
        pl.BlockSpec(params["w1i"].shape, const2),
        pl.BlockSpec(params["t1"].shape, const2),
        pl.BlockSpec(params["w2"].shape, const2),
        pl.BlockSpec(params["t2"].shape, const2),
        pl.BlockSpec(params["w3"].shape, const2),
        pl.BlockSpec(params["t3"].shape, const2),
        pl.BlockSpec(params["wog"].shape, const2),
        pl.BlockSpec(params["w4o"].shape, const2),
        pl.BlockSpec(params["c"].shape, const2),
    ]

    out = pl.pallas_call(
        neucf_kernel,
        out_shape=jax.ShapeDtypeStruct((Bp, 1), jnp.float32),
        grid=(n_tiles,),
        in_specs=in_specs,
        out_specs=pl.BlockSpec((tb, 1), tile2),
        compiler_params=pltpu.CompilerParams(
            dimension_semantics=("parallel",),      # shard tiles across TCs (v7x)
            vmem_limit_bytes=32 * 1024 * 1024,
        ),
    )(
        user_embed, item_embed,
        params["w1u"], params["w1i"], params["t1"],
        params["w2"], params["t2"],
        params["w3"], params["t3"],
        params["wog"], params["w4o"], params["c"],
    )
    return out[:B]


# ---------------------------------------------------------------------------
# Parameters (PyTorch-equivalent raw params + JAX-side folding)
# ---------------------------------------------------------------------------
def make_raw_params(key, D):
    """Raw params matching the nn.Module (Linear stored pre-transposed as
    (in, out); BatchNorm as gamma/beta/running_mean/running_var)."""
    dims = [(2 * D, 256), (256, 128), (128, 64), (64, D), (2 * D, 1)]
    keys = jax.random.split(key, 32)
    ki = iter(range(32))

    def lin(fan_in, fan_out):
        bound = 1.0 / float(fan_in) ** 0.5
        w = jax.random.uniform(keys[next(ki)], (fan_in, fan_out),
                               jnp.float32, -bound, bound)
        b = jax.random.uniform(keys[next(ki)], (1, fan_out),
                               jnp.float32, -bound, bound)
        return w, b

    def bn(n):
        gamma = 1.0 + 0.1 * jax.random.normal(keys[next(ki)], (1, n), jnp.float32)
        beta = 0.1 * jax.random.normal(keys[next(ki)], (1, n), jnp.float32)
        mean = 0.05 * jax.random.normal(keys[next(ki)], (1, n), jnp.float32)
        var = jnp.abs(1.0 + 0.1 * jax.random.normal(keys[next(ki)], (1, n), jnp.float32))
        return dict(gamma=gamma, beta=beta, mean=mean, var=var)

    p = {}
    p["w1"], p["b1"] = lin(*dims[0]); p["bn1"] = bn(256)
    p["w2"], p["b2"] = lin(*dims[1]); p["bn2"] = bn(128)
    p["w3"], p["b3"] = lin(*dims[2]); p["bn3"] = bn(64)
    p["w4"], p["b4"] = lin(*dims[3])
    p["wo"], p["bo"] = lin(*dims[4])
    return p


def fold_params(raw, D, eps=1e-5):
    """Fold Linear bias + eval-mode BatchNorm into the weights, split the
    first layer, fold layer 4 into the output head, and cast MXU weights to
    bf16.  Pure weight-side precompute; bit-for-bit equivalent math in f32."""
    def bn_affine(b):
        s = b["gamma"] / jnp.sqrt(b["var"] + eps)
        t = b["beta"] - b["mean"] * s
        return s, t

    s1, t1 = bn_affine(raw["bn1"])
    s2, t2 = bn_affine(raw["bn2"])
    s3, t3 = bn_affine(raw["bn3"])

    w1 = raw["w1"] * s1                      # column-wise scale (2D, 256)
    p = {}
    p["w1u"] = w1[:D].astype(jnp.bfloat16)   # (D, 256)
    p["w1i"] = w1[D:].astype(jnp.bfloat16)   # (D, 256)
    p["t1"] = raw["b1"] * s1 + t1            # (1, 256) f32

    p["w2"] = (raw["w2"] * s2).astype(jnp.bfloat16)
    p["t2"] = raw["b2"] * s2 + t2
    p["w3"] = (raw["w3"] * s3).astype(jnp.bfloat16)
    p["t3"] = raw["b3"] * s3 + t3

    wo_g = raw["wo"][:D]                     # (D, 1) — acts on gmf
    wo_m = raw["wo"][D:]                     # (D, 1) — acts on mlp output
    p["wog"] = wo_g.T                        # (1, D)  f32 (VPU operand)
    p["w4o"] = (raw["w4"] @ wo_m).T          # (1, 64) f32 (VPU operand)
    p["c"] = raw["b4"] @ wo_m + raw["bo"]    # (1, 1)  f32
    return p


def reference_forward(ue, ie, raw, eps=1e-5):
    """Pure-JAX f32 reference with the original (unfolded) eval-mode math."""
    def bn(z, b):
        return (z - b["mean"]) / jnp.sqrt(b["var"] + eps) * b["gamma"] + b["beta"]

    gmf = ue * ie
    x = jnp.concatenate([ue, ie], axis=-1)
    h = jnp.maximum(bn(x @ raw["w1"] + raw["b1"], raw["bn1"]), 0.0)
    h = jnp.maximum(bn(h @ raw["w2"] + raw["b2"], raw["bn2"]), 0.0)
    h = jnp.maximum(bn(h @ raw["w3"] + raw["b3"], raw["bn3"]), 0.0)
    mlp = h @ raw["w4"] + raw["b4"]          # Dropout: identity in eval.
    combined = jnp.concatenate([gmf, mlp], axis=-1)
    return jax.nn.sigmoid(combined @ raw["wo"] + raw["bo"])


# ---------------------------------------------------------------------------
# Demo / correctness check
# ---------------------------------------------------------------------------
if __name__ == "__main__":
    num_users, num_items, embedding_dim, batch = 64, 64, 32, 8

    key = jax.random.PRNGKey(0)
    k_emb_u, k_emb_i, k_ids, k_params = jax.random.split(key, 4)

    # Embedding tables (nn.Embedding default init ~ N(0, 1)).
    user_table = jax.random.normal(k_emb_u, (num_users, embedding_dim), jnp.float32)
    item_table = jax.random.normal(k_emb_i, (num_items, embedding_dim), jnp.float32)

    user_ids = jax.random.randint(k_ids, (batch,), 0, num_users)
    item_ids = jax.random.randint(jax.random.fold_in(k_ids, 1), (batch,), 0, num_items)

    # Embedding gather is glue; kept JAX-side.
    user_embed = user_table[user_ids]
    item_embed = item_table[item_ids]

    raw_params = make_raw_params(k_params, embedding_dim)
    params = fold_params(raw_params, embedding_dim)

    pred = neucf_forward(user_embed, item_embed, params)
    pred = jax.block_until_ready(pred)

    ref = reference_forward(user_embed, item_embed, raw_params)
    assert pred.shape == (batch, 1), pred.shape
    # bf16 matmul weights + approx reciprocal => loosened tolerance vs f32 ref.
    assert jnp.allclose(pred, ref, atol=3e-2), (pred, ref)

    print("KERNEL_OK")
</pallas_src>

<mosaic_0001>
module attributes {stable_mosaic.version = 11 : i64} {
  func.func @neucf_kernel(%arg0: i32, %arg1: memref<128x32xf32, #tpu.memory_space<vmem>>, %arg2: memref<128x32xf32, #tpu.memory_space<vmem>>, %arg3: memref<32x256xbf16, #tpu.memory_space<vmem>>, %arg4: memref<32x256xbf16, #tpu.memory_space<vmem>>, %arg5: memref<1x256xf32, #tpu.memory_space<vmem>>, %arg6: memref<256x128xbf16, #tpu.memory_space<vmem>>, %arg7: memref<1x128xf32, #tpu.memory_space<vmem>>, %arg8: memref<128x64xbf16, #tpu.memory_space<vmem>>, %arg9: memref<1x64xf32, #tpu.memory_space<vmem>>, %arg10: memref<1x32xf32, #tpu.memory_space<vmem>>, %arg11: memref<1x64xf32, #tpu.memory_space<vmem>>, %arg12: memref<1x1xf32, #tpu.memory_space<vmem>>, %arg13: memref<128x1xf32, #tpu.memory_space<vmem>>) attributes {dimension_semantics = [#tpu.dimension_semantics<parallel>], iteration_bounds = array<i64: 1>, scalar_prefetch = 0 : i64, scratch_operands = 0 : i64, tpu.core_type = #tpu.core_type<tc>, window_params = [{transform_indices = @transform_0, window_bounds = array<i64: 128, 32>}, {transform_indices = @transform_1, window_bounds = array<i64: 128, 32>}, {pipeline_mode = #tpu.pipeline_mode<synchronous>, transform_indices = @transform_2, window_bounds = array<i64: 32, 256>}, {pipeline_mode = #tpu.pipeline_mode<synchronous>, transform_indices = @transform_3, window_bounds = array<i64: 32, 256>}, {pipeline_mode = #tpu.pipeline_mode<synchronous>, transform_indices = @transform_4, window_bounds = array<i64: 1, 256>}, {pipeline_mode = #tpu.pipeline_mode<synchronous>, transform_indices = @transform_5, window_bounds = array<i64: 256, 128>}, {pipeline_mode = #tpu.pipeline_mode<synchronous>, transform_indices = @transform_6, window_bounds = array<i64: 1, 128>}, {pipeline_mode = #tpu.pipeline_mode<synchronous>, transform_indices = @transform_7, window_bounds = array<i64: 128, 64>}, {pipeline_mode = #tpu.pipeline_mode<synchronous>, transform_indices = @transform_8, window_bounds = array<i64: 1, 64>}, {pipeline_mode = #tpu.pipeline_mode<synchronous>, transform_indices = @transform_9, window_bounds = array<i64: 1, 32>}, {pipeline_mode = #tpu.pipeline_mode<synchronous>, transform_indices = @transform_10, window_bounds = array<i64: 1, 64>}, {pipeline_mode = #tpu.pipeline_mode<synchronous>, transform_indices = @transform_11, window_bounds = array<i64: 1, 1>}, {transform_indices = @transform_12, window_bounds = array<i64: 128, 1>}]} {
    %c0 = arith.constant 0 : index
    %c0_0 = arith.constant 0 : index
    %0 = vector.load %arg1[%c0, %c0_0] : memref<128x32xf32, #tpu.memory_space<vmem>>, vector<128x32xf32>
    %c0_1 = arith.constant 0 : index
    %c0_2 = arith.constant 0 : index
    %1 = vector.load %arg2[%c0_1, %c0_2] : memref<128x32xf32, #tpu.memory_space<vmem>>, vector<128x32xf32>
    %2 = arith.mulf %0, %1 : vector<128x32xf32>
    %3 = arith.truncf %0 : vector<128x32xf32> to vector<128x32xbf16>
    %c0_3 = arith.constant 0 : index
    %c0_4 = arith.constant 0 : index
    %4 = vector.load %arg3[%c0_3, %c0_4] : memref<32x256xbf16, #tpu.memory_space<vmem>>, vector<32x256xbf16>
    %cst = arith.constant dense<0.000000e+00> : vector<128x256xf32>
    %5 = tpu.matmul %3, %4, %cst {dimension_numbers = #tpu.dot_dimension_numbers<[1], [0], [0], [1], [0, 0, 1, 1], [], []>} : vector<128x32xbf16>, vector<32x256xbf16>, vector<128x256xf32> -> vector<128x256xf32>
    %6 = arith.truncf %1 : vector<128x32xf32> to vector<128x32xbf16>
    %c0_5 = arith.constant 0 : index
    %c0_6 = arith.constant 0 : index
    %7 = vector.load %arg4[%c0_5, %c0_6] : memref<32x256xbf16, #tpu.memory_space<vmem>>, vector<32x256xbf16>
    %cst_7 = arith.constant dense<0.000000e+00> : vector<128x256xf32>
    %8 = tpu.matmul %6, %7, %cst_7 {dimension_numbers = #tpu.dot_dimension_numbers<[1], [0], [0], [1], [0, 0, 1, 1], [], []>} : vector<128x32xbf16>, vector<32x256xbf16>, vector<128x256xf32> -> vector<128x256xf32>
    %9 = arith.addf %5, %8 : vector<128x256xf32>
    %c0_8 = arith.constant 0 : index
    %c0_9 = arith.constant 0 : index
    %10 = vector.load %arg5[%c0_8, %c0_9] : memref<1x256xf32, #tpu.memory_space<vmem>>, vector<1x256xf32>
    %11 = vector.broadcast %10 : vector<1x256xf32> to vector<128x256xf32>
    %12 = arith.addf %9, %11 : vector<128x256xf32>
    %cst_10 = arith.constant 0.000000e+00 : f32
    %13 = vector.broadcast %cst_10 : f32 to vector<128x256xf32>
    %14 = arith.maximumf %12, %13 : vector<128x256xf32>
    %15 = arith.truncf %14 : vector<128x256xf32> to vector<128x256xbf16>
    %c0_11 = arith.constant 0 : index
    %c0_12 = arith.constant 0 : index
    %16 = vector.load %arg6[%c0_11, %c0_12] : memref<256x128xbf16, #tpu.memory_space<vmem>>, vector<256x128xbf16>
    %cst_13 = arith.constant dense<0.000000e+00> : vector<128x128xf32>
    %17 = tpu.matmul %15, %16, %cst_13 {dimension_numbers = #tpu.dot_dimension_numbers<[1], [0], [0], [1], [0, 0, 1, 1], [], []>} : vector<128x256xbf16>, vector<256x128xbf16>, vector<128x128xf32> -> vector<128x128xf32>
    %c0_14 = arith.constant 0 : index
    %c0_15 = arith.constant 0 : index
    %18 = vector.load %arg7[%c0_14, %c0_15] : memref<1x128xf32, #tpu.memory_space<vmem>>, vector<1x128xf32>
    %19 = vector.broadcast %18 : vector<1x128xf32> to vector<128x128xf32>
    %20 = arith.addf %17, %19 : vector<128x128xf32>
    %cst_16 = arith.constant 0.000000e+00 : f32
    %21 = vector.broadcast %cst_16 : f32 to vector<128x128xf32>
    %22 = arith.maximumf %20, %21 : vector<128x128xf32>
    %23 = arith.truncf %22 : vector<128x128xf32> to vector<128x128xbf16>
    %c0_17 = arith.constant 0 : index
    %c0_18 = arith.constant 0 : index
    %24 = vector.load %arg8[%c0_17, %c0_18] : memref<128x64xbf16, #tpu.memory_space<vmem>>, vector<128x64xbf16>
    %cst_19 = arith.constant dense<0.000000e+00> : vector<128x64xf32>
    %25 = tpu.matmul %23, %24, %cst_19 {dimension_numbers = #tpu.dot_dimension_numbers<[1], [0], [0], [1], [0, 0, 1, 1], [], []>} : vector<128x128xbf16>, vector<128x64xbf16>, vector<128x64xf32> -> vector<128x64xf32>
    %c0_20 = arith.constant 0 : index
    %c0_21 = arith.constant 0 : index
    %26 = vector.load %arg9[%c0_20, %c0_21] : memref<1x64xf32, #tpu.memory_space<vmem>>, vector<1x64xf32>
    %27 = vector.broadcast %26 : vector<1x64xf32> to vector<128x64xf32>
    %28 = arith.addf %25, %27 : vector<128x64xf32>
    %cst_22 = arith.constant 0.000000e+00 : f32
    %29 = vector.broadcast %cst_22 : f32 to vector<128x64xf32>
    %30 = arith.maximumf %28, %29 : vector<128x64xf32>
    %c0_23 = arith.constant 0 : index
    %c0_24 = arith.constant 0 : index
    %31 = vector.load %arg10[%c0_23, %c0_24] : memref<1x32xf32, #tpu.memory_space<vmem>>, vector<1x32xf32>
    %32 = vector.broadcast %31 : vector<1x32xf32> to vector<128x32xf32>
    %33 = arith.mulf %2, %32 : vector<128x32xf32>
    %cst_25 = arith.constant dense<0.000000e+00> : vector<128xf32>
    %34 = vector.multi_reduction <add>, %33, %cst_25 [1] : vector<128x32xf32> to vector<128xf32>
    %35 = vector.shape_cast %34 : vector<128xf32> to vector<128x1xf32>
    %c0_26 = arith.constant 0 : index
    %c0_27 = arith.constant 0 : index
    %36 = vector.load %arg11[%c0_26, %c0_27] : memref<1x64xf32, #tpu.memory_space<vmem>>, vector<1x64xf32>
    %37 = vector.broadcast %36 : vector<1x64xf32> to vector<128x64xf32>
    %38 = arith.mulf %30, %37 : vector<128x64xf32>
    %cst_28 = arith.constant dense<0.000000e+00> : vector<128xf32>
    %39 = vector.multi_reduction <add>, %38, %cst_28 [1] : vector<128x64xf32> to vector<128xf32>
    %40 = vector.shape_cast %39 : vector<128xf32> to vector<128x1xf32>
    %41 = arith.addf %35, %40 : vector<128x1xf32>
    %c0_29 = arith.constant 0 : index
    %c0_30 = arith.constant 0 : index
    %42 = vector.load %arg12[%c0_29, %c0_30] : memref<1x1xf32, #tpu.memory_space<vmem>>, vector<1x1xf32>
    %43 = vector.broadcast %42 : vector<1x1xf32> to vector<128x1xf32>
    %44 = arith.addf %41, %43 : vector<128x1xf32>
    %cst_31 = arith.constant 0.000000e+00 : f32
    %45 = vector.broadcast %cst_31 : f32 to vector<128x1xf32>
    %46 = arith.subf %45, %44 : vector<128x1xf32>
    %47 = math.exp %46 : vector<128x1xf32>
    %cst_32 = arith.constant 1.000000e+00 : f32
    %48 = vector.broadcast %cst_32 : f32 to vector<128x1xf32>
    %49 = arith.addf %48, %47 : vector<128x1xf32>
    %50 = tpu.reciprocal %49 {approx = true} : vector<128x1xf32> -> vector<128x1xf32>
    %c0_33 = arith.constant 0 : index
    %c0_34 = arith.constant 0 : index
    %51 = vector.load %arg13[%c0_33, %c0_34] : memref<128x1xf32, #tpu.memory_space<vmem>>, vector<128x1xf32>
    tpu.vector_store %arg13[%c0_33, %c0_34], %50 {strides = array<i32>} : memref<128x1xf32, #tpu.memory_space<vmem>>, vector<128x1xf32>,
    return
  }
  func.func @transform_0(%arg0: i32) -> (i32, i32) {
    %c0_i32 = arith.constant 0 : i32
    %c0_i32_0 = arith.constant 0 : i32
    return %arg0, %c0_i32 : i32, i32
  }
  func.func @transform_1(%arg0: i32) -> (i32, i32) {
    %c0_i32 = arith.constant 0 : i32
    %c0_i32_0 = arith.constant 0 : i32
    return %arg0, %c0_i32 : i32, i32
  }
  func.func @transform_2(%arg0: i32) -> (i32, i32) {
    %c0_i32 = arith.constant 0 : i32
    %c0_i32_0 = arith.constant 0 : i32
    %c0_i32_1 = arith.constant 0 : i32
    return %c0_i32, %c0_i32_0 : i32, i32
  }
  func.func @transform_3(%arg0: i32) -> (i32, i32) {
    %c0_i32 = arith.constant 0 : i32
    %c0_i32_0 = arith.constant 0 : i32
    %c0_i32_1 = arith.constant 0 : i32
    return %c0_i32, %c0_i32_0 : i32, i32
  }
  func.func @transform_4(%arg0: i32) -> (i32, i32) {
    %c0_i32 = arith.constant 0 : i32
    %c0_i32_0 = arith.constant 0 : i32
    %c0_i32_1 = arith.constant 0 : i32
    return %c0_i32, %c0_i32_0 : i32, i32
  }
  func.func @transform_5(%arg0: i32) -> (i32, i32) {
    %c0_i32 = arith.constant 0 : i32
    %c0_i32_0 = arith.constant 0 : i32
    %c0_i32_1 = arith.constant 0 : i32
    return %c0_i32, %c0_i32_0 : i32, i32
  }
  func.func @transform_6(%arg0: i32) -> (i32, i32) {
    %c0_i32 = arith.constant 0 : i32
    %c0_i32_0 = arith.constant 0 : i32
    %c0_i32_1 = arith.constant 0 : i32
    return %c0_i32, %c0_i32_0 : i32, i32
  }
  func.func @transform_7(%arg0: i32) -> (i32, i32) {
    %c0_i32 = arith.constant 0 : i32
    %c0_i32_0 = arith.constant 0 : i32
    %c0_i32_1 = arith.constant 0 : i32
    return %c0_i32, %c0_i32_0 : i32, i32
  }
  func.func @transform_8(%arg0: i32) -> (i32, i32) {
    %c0_i32 = arith.constant 0 : i32
    %c0_i32_0 = arith.constant 0 : i32
    %c0_i32_1 = arith.constant 0 : i32
    return %c0_i32, %c0_i32_0 : i32, i32
  }
  func.func @transform_9(%arg0: i32) -> (i32, i32) {
    %c0_i32 = arith.constant 0 : i32
    %c0_i32_0 = arith.constant 0 : i32
    %c0_i32_1 = arith.constant 0 : i32
    return %c0_i32, %c0_i32_0 : i32, i32
  }
  func.func @transform_10(%arg0: i32) -> (i32, i32) {
    %c0_i32 = arith.constant 0 : i32
    %c0_i32_0 = arith.constant 0 : i32
    %c0_i32_1 = arith.constant 0 : i32
    return %c0_i32, %c0_i32_0 : i32, i32
  }
  func.func @transform_11(%arg0: i32) -> (i32, i32) {
    %c0_i32 = arith.constant 0 : i32
    %c0_i32_0 = arith.constant 0 : i32
    %c0_i32_1 = arith.constant 0 : i32
    return %c0_i32, %c0_i32_0 : i32, i32
  }
  func.func @transform_12(%arg0: i32) -> (i32, i32) {
    %c0_i32 = arith.constant 0 : i32
    %c0_i32_0 = arith.constant 0 : i32
    return %arg0, %c0_i32 : i32, i32
  }
}

</mosaic_0001>

<llo_original>
// kernel: tpu_custom_call.1
$region0: #{tpu_custom_call.1}
  #allocation0 [shape = 'u32[]', space=smem, size = 0x4, offset = 0x4, fixed_abs, tag = 'smem constant byte address 0x4 - core index']
  #allocation1 [shape = 'u32[72,128]{1,0:T(1,128)}', space=vmem, size = 0x9000, scoped, tag = 'internal scratch']
  #allocation2 [shape = 'f32[1,1]{1,0:T(1,128)S(1)}', space=vmem, size = 0x200, scoped, tag = 'scoped memory for tpu_custom_call.1']
  %s0 = inlined_call_operand.vmem [shape: f32[128,32], index: 0, kind: input, shape index: {}]
  %s1 = inlined_call_operand.vmem [shape: f32[128,32], index: 1, kind: input, shape index: {}]
  %s2 = inlined_call_operand.vmem [shape: bf16[32,256], index: 2, kind: input, shape index: {}]
  %s3 = inlined_call_operand.vmem [shape: bf16[32,256], index: 3, kind: input, shape index: {}]
  %s4 = inlined_call_operand.vmem [shape: f32[1,256], index: 4, kind: input, shape index: {}]
  %s5 = inlined_call_operand.vmem [shape: bf16[256,128], index: 5, kind: input, shape index: {}]
  %s6 = inlined_call_operand.vmem [shape: f32[1,128], index: 6, kind: input, shape index: {}]
  %s7 = inlined_call_operand.vmem [shape: bf16[128,64], index: 7, kind: input, shape index: {}]
  %s8 = inlined_call_operand.vmem [shape: f32[1,64], index: 8, kind: input, shape index: {}]
  %s9 = inlined_call_operand.vmem [shape: f32[1,32], index: 9, kind: input, shape index: {}]
  %s10 = inlined_call_operand.vmem [shape: f32[1,64], index: 10, kind: input, shape index: {}]
  %s11 = inlined_call_operand.<no memory space> [shape: f32[1,1], index: 11, kind: input, shape index: {}]
  %s12 = inlined_call_operand.vmem [shape: f32[128,1], index: 12, kind: output, shape index: {}]
  %s13 = sld [smem:[#allocation0]]
  $region58: #{tpu_custom_call.1} parent=0
    _
  %s15 = ssub.s32 1, %s13
  %s16 = scalar_select 0, %s15, %s13
  %v17 = vstv %s11
  %18 = vst [vmem:[#allocation2] sm:$0x1] %v17
  // Predicated region
  $region2: #{tpu_custom_call.1} parent=0 // pred_check
    _
  $region3: #{tpu_custom_call.1} parent=0 // pred_check_branch
    %20 = sbr.rel (0) target = $region5
  $region4: #{tpu_custom_call.1} parent=0 // pred_region
    _
  $region5: #{tpu_custom_call.1} parent=0 // pred_fallthru
    _
  // Predicated region
  $region6: #{tpu_custom_call.1} parent=0 // pred_check
    _
  $region7: #{tpu_custom_call.1} parent=0 // pred_check_branch
    %22 = sbr.rel (0) target = $region9
  $region8: #{tpu_custom_call.1} parent=0 // pred_region
    _
  $region9: #{tpu_custom_call.1} parent=0 // pred_fallthru
    _
  // Predicated region
  $region10: #{tpu_custom_call.1} parent=0 // pred_check
    _
  $region11: #{tpu_custom_call.1} parent=0 // pred_check_branch
    %24 = sbr.rel (0) target = $region13
  $region12: #{tpu_custom_call.1} parent=0 // pred_region
    _
  $region13: #{tpu_custom_call.1} parent=0 // pred_fallthru
    _
  // Predicated region
  $region14: #{tpu_custom_call.1} parent=0 // pred_check
    _
  $region15: #{tpu_custom_call.1} parent=0 // pred_check_branch
    %26 = sbr.rel (0) target = $region17
  $region16: #{tpu_custom_call.1} parent=0 // pred_region
    _
  $region17: #{tpu_custom_call.1} parent=0 // pred_fallthru
    _
  // Predicated region
  $region18: #{tpu_custom_call.1} parent=0 // pred_check
    _
  $region19: #{tpu_custom_call.1} parent=0 // pred_check_branch
    %28 = sbr.rel (0) target = $region21
  $region20: #{tpu_custom_call.1} parent=0 // pred_region
    _
  $region21: #{tpu_custom_call.1} parent=0 // pred_fallthru
    _
  // Predicated region
  $region22: #{tpu_custom_call.1} parent=0 // pred_check
    _
  $region23: #{tpu_custom_call.1} parent=0 // pred_check_branch
    %30 = sbr.rel (0) target = $region25
  $region24: #{tpu_custom_call.1} parent=0 // pred_region
    _
  $region25: #{tpu_custom_call.1} parent=0 // pred_fallthru
    _
  // Predicated region
  $region26: #{tpu_custom_call.1} parent=0 // pred_check
    _
  $region27: #{tpu_custom_call.1} parent=0 // pred_check_branch
    %32 = sbr.rel (0) target = $region29
  $region28: #{tpu_custom_call.1} parent=0 // pred_region
    _
  $region29: #{tpu_custom_call.1} parent=0 // pred_fallthru
    _
  // Predicated region
  $region30: #{tpu_custom_call.1} parent=0 // pred_check
    _
  $region31: #{tpu_custom_call.1} parent=0 // pred_check_branch
    %34 = sbr.rel (0) target = $region33
  $region32: #{tpu_custom_call.1} parent=0 // pred_region
    _
  $region33: #{tpu_custom_call.1} parent=0 // pred_fallthru
    _
  // Predicated region
  $region34: #{tpu_custom_call.1} parent=0 // pred_check
    _
  $region35: #{tpu_custom_call.1} parent=0 // pred_check_branch
    %36 = sbr.rel (0) target = $region37
  $region36: #{tpu_custom_call.1} parent=0 // pred_region
    _
  $region37: #{tpu_custom_call.1} parent=0 // pred_fallthru
    _
  // Predicated region
  $region38: #{tpu_custom_call.1} parent=0 // pred_check
    _
  $region39: #{tpu_custom_call.1} parent=0 // pred_check_branch
    %38 = sbr.rel (0) target = $region41
  $region40: #{tpu_custom_call.1} parent=0 // pred_region
    _
  $region41: #{tpu_custom_call.1} parent=0 // pred_fallthru
    _
  // Predicated region
  $region42: #{tpu_custom_call.1} parent=0 // pred_check
    _
  $region43: #{tpu_custom_call.1} parent=0 // pred_check_branch
    %40 = sbr.rel (0) target = $region45
  $region44: #{tpu_custom_call.1} parent=0 // pred_region
    _
  $region45: #{tpu_custom_call.1} parent=0 // pred_fallthru
    _
  // Predicated region
  $region46: #{tpu_custom_call.1} parent=0 // pred_check
    _
  $region47: #{tpu_custom_call.1} parent=0 // pred_check_branch
    %42 = sbr.rel (0) target = $region49
  $region48: #{tpu_custom_call.1} parent=0 // pred_region
    _
  $region49: #{tpu_custom_call.1} parent=0 // pred_fallthru
    _
  %v44 = vld [vmem:[%s0] sm:$0xff]
  %v45 = vld [vmem:[%s0 + $0x8] sm:$0xff]
  %v46 = vld [vmem:[%s0 + $0x10] sm:$0xff]
  %v47 = vld [vmem:[%s0 + $0x18] sm:$0xff]
  %v48 = vld [vmem:[%s0 + $0x20] sm:$0xff]
  %v49 = vld [vmem:[%s0 + $0x28] sm:$0xff]
  %v50 = vld [vmem:[%s0 + $0x30] sm:$0xff]
  %v51 = vld [vmem:[%s0 + $0x38] sm:$0xff]
  %v52 = vld [vmem:[%s0 + $0x40] sm:$0xff]
  %v53 = vld [vmem:[%s0 + $0x48] sm:$0xff]
  %v54 = vld [vmem:[%s0 + $0x50] sm:$0xff]
  %v55 = vld [vmem:[%s0 + $0x58] sm:$0xff]
  %v56 = vld [vmem:[%s0 + $0x60] sm:$0xff]
  %v57 = vld [vmem:[%s0 + $0x68] sm:$0xff]
  %v58 = vld [vmem:[%s0 + $0x70] sm:$0xff]
  %v59 = vld [vmem:[%s0 + $0x78] sm:$0xff]
  %v60 = vld [vmem:[%s1] sm:$0xff]
  %v61 = vld [vmem:[%s1 + $0x8] sm:$0xff]
  %v62 = vld [vmem:[%s1 + $0x10] sm:$0xff]
  %v63 = vld [vmem:[%s1 + $0x18] sm:$0xff]
  %v64 = vld [vmem:[%s1 + $0x20] sm:$0xff]
  %v65 = vld [vmem:[%s1 + $0x28] sm:$0xff]
  %v66 = vld [vmem:[%s1 + $0x30] sm:$0xff]
  %v67 = vld [vmem:[%s1 + $0x38] sm:$0xff]
  %v68 = vld [vmem:[%s1 + $0x40] sm:$0xff]
  %v69 = vld [vmem:[%s1 + $0x48] sm:$0xff]
  %v70 = vld [vmem:[%s1 + $0x50] sm:$0xff]
  %v71 = vld [vmem:[%s1 + $0x58] sm:$0xff]
  %v72 = vld [vmem:[%s1 + $0x60] sm:$0xff]
  %v73 = vld [vmem:[%s1 + $0x68] sm:$0xff]
  %v74 = vld [vmem:[%s1 + $0x70] sm:$0xff]
  %v75 = vld [vmem:[%s1 + $0x78] sm:$0xff]
  %v76 = vmul.f32 %v44, %v60
  %v77 = vmul.f32 %v45, %v61
  %v78 = vmul.f32 %v46, %v62
  %v79 = vmul.f32 %v47, %v63
  %v80 = vmul.f32 %v48, %v64
  %v81 = vmul.f32 %v49, %v65
  %v82 = vmul.f32 %v50, %v66
  %v83 = vmul.f32 %v51, %v67
  %v84 = vmul.f32 %v52, %v68
  %v85 = vmul.f32 %v53, %v69
  %v86 = vmul.f32 %v54, %v70
  %v87 = vmul.f32 %v55, %v71
  %v88 = vmul.f32 %v56, %v72
  %v89 = vmul.f32 %v57, %v73
  %v90 = vmul.f32 %v58, %v74
  %v91 = vmul.f32 %v59, %v75
  %v92 = vpack.c.bf16 %v45, %v44
  %v93 = vpack.c.bf16 %v47, %v46
  %v94 = vpack.c.bf16 %v49, %v48
  %v95 = vpack.c.bf16 %v51, %v50
  %v96 = vpack.c.bf16 %v53, %v52
  %v97 = vpack.c.bf16 %v55, %v54
  %v98 = vpack.c.bf16 %v57, %v56
  %v99 = vpack.c.bf16 %v59, %v58
  %v100 = vld [vmem:[%s2] sm:$0xff]
  %v101 = vld [vmem:[%s2 + $0x8] sm:$0xff]
  %v102 = vld [vmem:[%s2 + $0x10] sm:$0xff]
  %v103 = vld [vmem:[%s2 + $0x18] sm:$0xff]
  %v104 = vpack.c.bf16 %v61, %v60
  %v105 = vpack.c.bf16 %v63, %v62
  %v106 = vpack.c.bf16 %v65, %v64
  %v107 = vpack.c.bf16 %v67, %v66
  %v108 = vpack.c.bf16 %v69, %v68
  %v109 = vpack.c.bf16 %v71, %v70
  %v110 = vpack.c.bf16 %v73, %v72
  %v111 = vpack.c.bf16 %v75, %v74
  %v112 = vld [vmem:[%s3] sm:$0xff]
  %v113 = vld [vmem:[%s3 + $0x8] sm:$0xff]
  %v114 = vld [vmem:[%s3 + $0x10] sm:$0xff]
  %v115 = vld [vmem:[%s3 + $0x18] sm:$0xff]
  %v120 = vunpack.c.l.b16 %v112
  %v121 = vunpack.c.h.b16 %v112
  %v122 = vunpack.c.l.b16 %v113
  %v123 = vunpack.c.h.b16 %v113
  %v124 = vunpack.c.l.b16 %v114
  %v125 = vunpack.c.h.b16 %v114
  %v126 = vunpack.c.l.b16 %v115
  %v127 = vunpack.c.h.b16 %v115
  %v128 = vpack.c.b16 %v122, %v120
  %v129 = vpack.c.b16 %v123, %v121
  %v130 = vpack.c.b16 %v126, %v124
  %v131 = vpack.c.b16 %v127, %v125
  %vm136 = vcmask 261120
  %v138 = vsel %vm136, %v104, 0
  %v141 = vsel %vm136, %v105, 0
  %v144 = vsel %vm136, %v106, 0
  %v147 = vsel %vm136, %v107, 0
  %v150 = vsel %vm136, %v108, 0
  %v153 = vsel %vm136, %v109, 0
  %v156 = vsel %vm136, %v110, 0
  %v159 = vsel %vm136, %v111, 0
  %161 = vmatpush.bf16.msra.mxu0 0
  %162 = vmatpush.bf16.msra.mxu0 0
  %163 = vmatpush.bf16.msra.mxu0 0
  %164 = vmatpush.bf16.msra.mxu0 0
  %165 = vmatpush.bf16.msra.mxu0 0
  %166 = vmatpush.bf16.msra.mxu0 0
  %167 = vmatpush.bf16.msra.mxu0 %v130
  %168 = vmatpush.bf16.msra.mxu0 %v128
  %169 = vmatmul.bf16.gmra.mxu0 %v138
  %v170 = vpop.f32.mrf.mxu0
  %v171 = vadd.f32 0.0, %v170
  %v172 = vpop.f32.mrf.mxu0
  %v173 = vadd.f32 0.0, %v172
  %174 = vmatmul.bf16.gmra.mxu0 %v141
  %v175 = vpop.f32.mrf.mxu0
  %v176 = vadd.f32 0.0, %v175
  %v177 = vpop.f32.mrf.mxu0
  %v178 = vadd.f32 0.0, %v177
  %179 = vmatmul.bf16.gmra.mxu0 %v144
  %v180 = vpop.f32.mrf.mxu0
  %v181 = vadd.f32 0.0, %v180
  %v182 = vpop.f32.mrf.mxu0
  %v183 = vadd.f32 0.0, %v182
  %184 = vmatmul.bf16.gmra.mxu0 %v147
  %v185 = vpop.f32.mrf.mxu0
  %v186 = vadd.f32 0.0, %v185
  %v187 = vpop.f32.mrf.mxu0
  %v188 = vadd.f32 0.0, %v187
  %189 = vmatmul.bf16.gmra.mxu0 %v150
  %v190 = vpop.f32.mrf.mxu0
  %v191 = vadd.f32 0.0, %v190
  %v192 = vpop.f32.mrf.mxu0
  %v193 = vadd.f32 0.0, %v192
  %194 = vmatmul.bf16.gmra.mxu0 %v153
  %v195 = vpop.f32.mrf.mxu0
  %v196 = vadd.f32 0.0, %v195
  %v197 = vpop.f32.mrf.mxu0
  %v198 = vadd.f32 0.0, %v197
  %199 = vmatmul.bf16.gmra.mxu0 %v156
  %v200 = vpop.f32.mrf.mxu0
  %v201 = vadd.f32 0.0, %v200
  %v202 = vpop.f32.mrf.mxu0
  %v203 = vadd.f32 0.0, %v202
  %204 = vmatmul.bf16.gmra.mxu0 %v159
  %v205 = vpop.f32.mrf.mxu0
  %v206 = vadd.f32 0.0, %v205
  %v207 = vpop.f32.mrf.mxu0
  %v208 = vadd.f32 0.0, %v207
  %209 = vdwg.mxu0
  %210 = vmatpush.bf16.msra.mxu0 0
  %211 = vmatpush.bf16.msra.mxu0 0
  %212 = vmatpush.bf16.msra.mxu0 0
  %213 = vmatpush.bf16.msra.mxu0 0
  %214 = vmatpush.bf16.msra.mxu0 0
  %215 = vmatpush.bf16.msra.mxu0 0
  %216 = vmatpush.bf16.msra.mxu0 %v131
  %217 = vmatpush.bf16.msra.mxu0 %v129
  %218 = vmatmul.bf16.gmra.mxu0 %v138
  %v219 = vpop.f32.mrf.mxu0
  %v220 = vadd.f32 0.0, %v219
  %v221 = vpop.f32.mrf.mxu0
  %v222 = vadd.f32 0.0, %v221
  %223 = vmatmul.bf16.gmra.mxu0 %v141
  %v224 = vpop.f32.mrf.mxu0
  %v225 = vadd.f32 0.0, %v224
  %v226 = vpop.f32.mrf.mxu0
  %v227 = vadd.f32 0.0, %v226
  %228 = vmatmul.bf16.gmra.mxu0 %v144
  %v229 = vpop.f32.mrf.mxu0
  %v230 = vadd.f32 0.0, %v229
  %v231 = vpop.f32.mrf.mxu0
  %v232 = vadd.f32 0.0, %v231
  %233 = vmatmul.bf16.gmra.mxu0 %v147
  %v234 = vpop.f32.mrf.mxu0
  %v235 = vadd.f32 0.0, %v234
  %v236 = vpop.f32.mrf.mxu0
  %v237 = vadd.f32 0.0, %v236
  %238 = vmatmul.bf16.gmra.mxu0 %v150
  %v239 = vpop.f32.mrf.mxu0
  %v240 = vadd.f32 0.0, %v239
  %v241 = vpop.f32.mrf.mxu0
  %v242 = vadd.f32 0.0, %v241
  %243 = vmatmul.bf16.gmra.mxu0 %v153
  %v244 = vpop.f32.mrf.mxu0
  %v245 = vadd.f32 0.0, %v244
  %v246 = vpop.f32.mrf.mxu0
  %v247 = vadd.f32 0.0, %v246
  %248 = vmatmul.bf16.gmra.mxu0 %v156
  %v249 = vpop.f32.mrf.mxu0
  %v250 = vadd.f32 0.0, %v249
  %v251 = vpop.f32.mrf.mxu0
  %v252 = vadd.f32 0.0, %v251
  %253 = vmatmul.bf16.gmra.mxu0 %v159
  %v254 = vpop.f32.mrf.mxu0
  %v255 = vadd.f32 0.0, %v254
  %v256 = vpop.f32.mrf.mxu0
  %v257 = vadd.f32 0.0, %v256
  %258 = vdwg.mxu0
  %v263 = vunpack.c.l.b16 %v100
  %v264 = vunpack.c.h.b16 %v100
  %v265 = vunpack.c.l.b16 %v101
  %v266 = vunpack.c.h.b16 %v101
  %v267 = vunpack.c.l.b16 %v102
  %v268 = vunpack.c.h.b16 %v102
  %v269 = vunpack.c.l.b16 %v103
  %v270 = vunpack.c.h.b16 %v103
  %v271 = vpack.c.b16 %v265, %v263
  %v272 = vpack.c.b16 %v266, %v264
  %v273 = vpack.c.b16 %v269, %v267
  %v274 = vpack.c.b16 %v270, %v268
  %v280 = vsel %vm136, %v92, 0
  %v283 = vsel %vm136, %v93, 0
  %v286 = vsel %vm136, %v94, 0
  %v289 = vsel %vm136, %v95, 0
  %v292 = vsel %vm136, %v96, 0
  %v295 = vsel %vm136, %v97, 0
  %v298 = vsel %vm136, %v98, 0
  %v301 = vsel %vm136, %v99, 0
  %303 = vmatpush.bf16.msra.mxu0 0
  %304 = vmatpush.bf16.msra.mxu0 0
  %305 = vmatpush.bf16.msra.mxu0 0
  %306 = vmatpush.bf16.msra.mxu0 0
  %307 = vmatpush.bf16.msra.mxu0 0
  %308 = vmatpush.bf16.msra.mxu0 0
  %309 = vmatpush.bf16.msra.mxu0 %v273
  %310 = vmatpush.bf16.msra.mxu0 %v271
  %311 = vmatmul.bf16.gmra.mxu0 %v280
  %v312 = vpop.f32.mrf.mxu0
  %v313 = vadd.f32 %v171, %v312
  %v314 = vpop.f32.mrf.mxu0
  %v315 = vadd.f32 %v173, %v314
  %316 = vmatmul.bf16.gmra.mxu0 %v283
  %v317 = vpop.f32.mrf.mxu0
  %v318 = vadd.f32 %v176, %v317
  %v319 = vpop.f32.mrf.mxu0
  %v320 = vadd.f32 %v178, %v319
  %321 = vmatmul.bf16.gmra.mxu0 %v286
  %v322 = vpop.f32.mrf.mxu0
  %v323 = vadd.f32 %v181, %v322
  %v324 = vpop.f32.mrf.mxu0
  %v325 = vadd.f32 %v183, %v324
  %326 = vmatmul.bf16.gmra.mxu0 %v289
  %v327 = vpop.f32.mrf.mxu0
  %v328 = vadd.f32 %v186, %v327
  %v329 = vpop.f32.mrf.mxu0
  %v330 = vadd.f32 %v188, %v329
  %331 = vmatmul.bf16.gmra.mxu0 %v292
  %v332 = vpop.f32.mrf.mxu0
  %v333 = vadd.f32 %v191, %v332
  %v334 = vpop.f32.mrf.mxu0
  %v335 = vadd.f32 %v193, %v334
  %336 = vmatmul.bf16.gmra.mxu0 %v295
  %v337 = vpop.f32.mrf.mxu0
  %v338 = vadd.f32 %v196, %v337
  %v339 = vpop.f32.mrf.mxu0
  %v340 = vadd.f32 %v198, %v339
  %341 = vmatmul.bf16.gmra.mxu0 %v298
  %v342 = vpop.f32.mrf.mxu0
  %v343 = vadd.f32 %v201, %v342
  %v344 = vpop.f32.mrf.mxu0
  %v345 = vadd.f32 %v203, %v344
  %346 = vmatmul.bf16.gmra.mxu0 %v301
  %v347 = vpop.f32.mrf.mxu0
  %v348 = vadd.f32 %v206, %v347
  %v349 = vpop.f32.mrf.mxu0
  %v350 = vadd.f32 %v208, %v349
  %351 = vdwg.mxu0
  %352 = vmatpush.bf16.msra.mxu0 0
  %353 = vmatpush.bf16.msra.mxu0 0
  %354 = vmatpush.bf16.msra.mxu0 0
  %355 = vmatpush.bf16.msra.mxu0 0
  %356 = vmatpush.bf16.msra.mxu0 0
  %357 = vmatpush.bf16.msra.mxu0 0
  %358 = vmatpush.bf16.msra.mxu0 %v274
  %359 = vmatpush.bf16.msra.mxu0 %v272
  %360 = vmatmul.bf16.gmra.mxu0 %v280
  %v361 = vpop.f32.mrf.mxu0
  %v362 = vadd.f32 %v220, %v361
  %v363 = vpop.f32.mrf.mxu0
  %v364 = vadd.f32 %v222, %v363
  %365 = vmatmul.bf16.gmra.mxu0 %v283
  %v366 = vpop.f32.mrf.mxu0
  %v367 = vadd.f32 %v225, %v366
  %v368 = vpop.f32.mrf.mxu0
  %v369 = vadd.f32 %v227, %v368
  %370 = vmatmul.bf16.gmra.mxu0 %v286
  %v371 = vpop.f32.mrf.mxu0
  %v372 = vadd.f32 %v230, %v371
  %v373 = vpop.f32.mrf.mxu0
  %v374 = vadd.f32 %v232, %v373
  %375 = vmatmul.bf16.gmra.mxu0 %v289
  %v376 = vpop.f32.mrf.mxu0
  %v377 = vadd.f32 %v235, %v376
  %v378 = vpop.f32.mrf.mxu0
  %v379 = vadd.f32 %v237, %v378
  %380 = vmatmul.bf16.gmra.mxu0 %v292
  %v381 = vpop.f32.mrf.mxu0
  %v382 = vadd.f32 %v240, %v381
  %v383 = vpop.f32.mrf.mxu0
  %v384 = vadd.f32 %v242, %v383
  %385 = vmatmul.bf16.gmra.mxu0 %v295
  %v386 = vpop.f32.mrf.mxu0
  %v387 = vadd.f32 %v245, %v386
  %v388 = vpop.f32.mrf.mxu0
  %v389 = vadd.f32 %v247, %v388
  %390 = vmatmul.bf16.gmra.mxu0 %v298
  %v391 = vpop.f32.mrf.mxu0
  %v392 = vadd.f32 %v250, %v391
  %v393 = vpop.f32.mrf.mxu0
  %v394 = vadd.f32 %v252, %v393
  %395 = vmatmul.bf16.gmra.mxu0 %v301
  %v396 = vpop.f32.mrf.mxu0
  %v397 = vadd.f32 %v255, %v396
  %v398 = vpop.f32.mrf.mxu0
  %v399 = vadd.f32 %v257, %v398
  %400 = vdwg.mxu0
  %v401 = vld [vmem:[%s4] sm:$0x3]
  %v403 = vperm.slane %v401, 0
  %v404 = vperm.slane %v401, 1
  %v407 = vadd.f32 %v313, %v403
  %v408 = vadd.f32 %v362, %v404
  %v409 = vadd.f32 %v315, %v403
  %v410 = vadd.f32 %v364, %v404
  %v411 = vadd.f32 %v318, %v403
  %v412 = vadd.f32 %v367, %v404
  %v413 = vadd.f32 %v320, %v403
  %v414 = vadd.f32 %v369, %v404
  %v415 = vadd.f32 %v323, %v403
  %v416 = vadd.f32 %v372, %v404
  %v417 = vadd.f32 %v325, %v403
  %v418 = vadd.f32 %v374, %v404
  %v419 = vadd.f32 %v328, %v403
  %v420 = vadd.f32 %v377, %v404
  %v421 = vadd.f32 %v330, %v403
  %v422 = vadd.f32 %v379, %v404
  %v423 = vadd.f32 %v333, %v403
  %v424 = vadd.f32 %v382, %v404
  %v425 = vadd.f32 %v335, %v403
  %v426 = vadd.f32 %v384, %v404
  %v427 = vadd.f32 %v338, %v403
  %v428 = vadd.f32 %v387, %v404
  %v429 = vadd.f32 %v340, %v403
  %v430 = vadd.f32 %v389, %v404
  %v431 = vadd.f32 %v343, %v403
  %v432 = vadd.f32 %v392, %v404
  %v433 = vadd.f32 %v345, %v403
  %v434 = vadd.f32 %v394, %v404
  %v435 = vadd.f32 %v348, %v403
  %v436 = vadd.f32 %v397, %v404
  %v437 = vadd.f32 %v350, %v403
  %v438 = vadd.f32 %v399, %v404
  %v439 = vmax.f32 %v407, 0.0
  %v440 = vmax.f32 %v408, 0.0
  %v441 = vmax.f32 %v409, 0.0
  %v442 = vmax.f32 %v410, 0.0
  %v443 = vmax.f32 %v411, 0.0
  %v444 = vmax.f32 %v412, 0.0
  %v445 = vmax.f32 %v413, 0.0
  %v446 = vmax.f32 %v414, 0.0
  %v447 = vmax.f32 %v415, 0.0
  %v448 = vmax.f32 %v416, 0.0
  %v449 = vmax.f32 %v417, 0.0
  %v450 = vmax.f32 %v418, 0.0
  %v451 = vmax.f32 %v419, 0.0
  %v452 = vmax.f32 %v420, 0.0
  %v453 = vmax.f32 %v421, 0.0
  %v454 = vmax.f32 %v422, 0.0
  %v455 = vmax.f32 %v423, 0.0
  %v456 = vmax.f32 %v424, 0.0
  %v457 = vmax.f32 %v425, 0.0
  %v458 = vmax.f32 %v426, 0.0
  %v459 = vmax.f32 %v427, 0.0
  %v460 = vmax.f32 %v428, 0.0
  %v461 = vmax.f32 %v429, 0.0
  %v462 = vmax.f32 %v430, 0.0
  %v463 = vmax.f32 %v431, 0.0
  %v464 = vmax.f32 %v432, 0.0
  %v465 = vmax.f32 %v433, 0.0
  %v466 = vmax.f32 %v434, 0.0
  %v467 = vmax.f32 %v435, 0.0
  %v468 = vmax.f32 %v436, 0.0
  %v469 = vmax.f32 %v437, 0.0
  %v470 = vmax.f32 %v438, 0.0
  %v471 = vpack.c.bf16 %v441, %v439
  %v472 = vpack.c.bf16 %v442, %v440
  %v473 = vpack.c.bf16 %v445, %v443
  %v474 = vpack.c.bf16 %v446, %v444
  %v475 = vpack.c.bf16 %v449, %v447
  %v476 = vpack.c.bf16 %v450, %v448
  %v477 = vpack.c.bf16 %v453, %v451
  %v478 = vpack.c.bf16 %v454, %v452
  %v479 = vpack.c.bf16 %v457, %v455
  %v480 = vpack.c.bf16 %v458, %v456
  %v481 = vpack.c.bf16 %v461, %v459
  %v482 = vpack.c.bf16 %v462, %v460
  %v483 = vpack.c.bf16 %v465, %v463
  %v484 = vpack.c.bf16 %v466, %v464
  %v485 = vpack.c.bf16 %v469, %v467
  %v486 = vpack.c.bf16 %v470, %v468
  %v487 = vld [vmem:[%s5] sm:$0xf]
  %v488 = vld [vmem:[%s5 + $0x4] sm:$0xf]
  %v489 = vld [vmem:[%s5 + $0x8] sm:$0xf]
  %v490 = vld [vmem:[%s5 + $0xc] sm:$0xf]
  %v491 = vld [vmem:[%s5 + $0x10] sm:$0xf]
  %v492 = vld [vmem:[%s5 + $0x14] sm:$0xf]
  %v493 = vld [vmem:[%s5 + $0x18] sm:$0xf]
  %v494 = vld [vmem:[%s5 + $0x1c] sm:$0xf]
  %v495 = vld [vmem:[%s5 + $0x20] sm:$0xf]
  %v496 = vld [vmem:[%s5 + $0x24] sm:$0xf]
  %v497 = vld [vmem:[%s5 + $0x28] sm:$0xf]
  %v498 = vld [vmem:[%s5 + $0x2c] sm:$0xf]
  %v499 = vld [vmem:[%s5 + $0x30] sm:$0xf]
  %v500 = vld [vmem:[%s5 + $0x34] sm:$0xf]
  %v501 = vld [vmem:[%s5 + $0x38] sm:$0xf]
  %v502 = vld [vmem:[%s5 + $0x3c] sm:$0xf]
  %v503 = vld [vmem:[%s5 + $0x40] sm:$0xf]
  %v504 = vld [vmem:[%s5 + $0x44] sm:$0xf]
  %v505 = vld [vmem:[%s5 + $0x48] sm:$0xf]
  %v506 = vld [vmem:[%s5 + $0x4c] sm:$0xf]
  %v507 = vld [vmem:[%s5 + $0x50] sm:$0xf]
  %v508 = vld [vmem:[%s5 + $0x54] sm:$0xf]
  %v509 = vld [vmem:[%s5 + $0x58] sm:$0xf]
  %v510 = vld [vmem:[%s5 + $0x5c] sm:$0xf]
  %v511 = vld [vmem:[%s5 + $0x60] sm:$0xf]
  %v512 = vld [vmem:[%s5 + $0x64] sm:$0xf]
  %v513 = vld [vmem:[%s5 + $0x68] sm:$0xf]
  %v514 = vld [vmem:[%s5 + $0x6c] sm:$0xf]
  %v515 = vld [vmem:[%s5 + $0x70] sm:$0xf]
  %v516 = vld [vmem:[%s5 + $0x74] sm:$0xf]
  %v517 = vld [vmem:[%s5 + $0x78] sm:$0xf]
  %v518 = vld [vmem:[%s5 + $0x7c] sm:$0xf]
  %v519 = vld [vmem:[%s6] sm:$0x1]
  %v521 = vperm.slane %v519, 0
  %v555 = vunpack.c.l.b16 %v487
  %v556 = vunpack.c.l.b16 %v488
  %v557 = vunpack.c.l.b16 %v489
  %v558 = vunpack.c.l.b16 %v490
  %v559 = vunpack.c.l.b16 %v491
  %v560 = vunpack.c.l.b16 %v492
  %v561 = vunpack.c.l.b16 %v493
  %v562 = vunpack.c.l.b16 %v494
  %v563 = vunpack.c.l.b16 %v495
  %v564 = vunpack.c.l.b16 %v496
  %v565 = vunpack.c.l.b16 %v497
  %v566 = vunpack.c.l.b16 %v498
  %v567 = vunpack.c.l.b16 %v499
  %v568 = vunpack.c.l.b16 %v500
  %v569 = vunpack.c.l.b16 %v501
  %v570 = vunpack.c.l.b16 %v502
  %v571 = vunpack.c.l.b16 %v503
  %v572 = vunpack.c.l.b16 %v504
  %v573 = vunpack.c.l.b16 %v505
  %v574 = vunpack.c.l.b16 %v506
  %v575 = vunpack.c.l.b16 %v507
  %v576 = vunpack.c.l.b16 %v508
  %v577 = vunpack.c.l.b16 %v509
  %v578 = vunpack.c.l.b16 %v510
  %v579 = vunpack.c.l.b16 %v511
  %v580 = vunpack.c.l.b16 %v512
  %v581 = vunpack.c.l.b16 %v513
  %v582 = vunpack.c.l.b16 %v514
  %v583 = vunpack.c.l.b16 %v515
  %v584 = vunpack.c.l.b16 %v516
  %v585 = vunpack.c.l.b16 %v517
  %v586 = vunpack.c.l.b16 %v518
  %v587 = vpack.c.b16 %v556, %v555
  %v588 = vpack.c.b16 %v558, %v557
  %v589 = vpack.c.b16 %v560, %v559
  %v590 = vpack.c.b16 %v562, %v561
  %v591 = vpack.c.b16 %v564, %v563
  %v592 = vpack.c.b16 %v566, %v565
  %v593 = vpack.c.b16 %v568, %v567
  %v594 = vpack.c.b16 %v570, %v569
  %v595 = vpack.c.b16 %v572, %v571
  %v596 = vpack.c.b16 %v574, %v573
  %v597 = vpack.c.b16 %v576, %v575
  %v598 = vpack.c.b16 %v578, %v577
  %v599 = vpack.c.b16 %v580, %v579
  %v600 = vpack.c.b16 %v582, %v581
  %v601 = vpack.c.b16 %v584, %v583
  %v602 = vpack.c.b16 %v586, %v585
  %619 = vmatpush.bf16.msra.mxu0 %v594
  %620 = vmatpush.bf16.msra.mxu0 %v593
  %621 = vmatpush.bf16.msra.mxu0 %v592
  %622 = vmatpush.bf16.msra.mxu0 %v591
  %623 = vmatpush.bf16.msra.mxu0 %v590
  %624 = vmatpush.bf16.msra.mxu0 %v589
  %625 = vmatpush.bf16.msra.mxu0 %v588
  %626 = vmatpush.bf16.msra.mxu0 %v587
  %627 = vmatmul.bf16.gmra.mxu0 %v471
  %v628 = vpop.f32.mrf.mxu0
  %v629 = vadd.f32 %v521, %v628
  %v630 = vpop.f32.mrf.mxu0
  %v631 = vadd.f32 %v521, %v630
  %632 = vmatmul.bf16.gmra.mxu0 %v473
  %v633 = vpop.f32.mrf.mxu0
  %v634 = vadd.f32 %v521, %v633
  %v635 = vpop.f32.mrf.mxu0
  %v636 = vadd.f32 %v521, %v635
  %637 = vmatmul.bf16.gmra.mxu0 %v475
  %v638 = vpop.f32.mrf.mxu0
  %v639 = vadd.f32 %v521, %v638
  %v640 = vpop.f32.mrf.mxu0
  %v641 = vadd.f32 %v521, %v640
  %642 = vmatmul.bf16.gmra.mxu0 %v477
  %v643 = vpop.f32.mrf.mxu0
  %v644 = vadd.f32 %v521, %v643
  %v645 = vpop.f32.mrf.mxu0
  %v646 = vadd.f32 %v521, %v645
  %647 = vmatmul.bf16.gmra.mxu0 %v479
  %v648 = vpop.f32.mrf.mxu0
  %v649 = vadd.f32 %v521, %v648
  %v650 = vpop.f32.mrf.mxu0
  %v651 = vadd.f32 %v521, %v650
  %652 = vmatmul.bf16.gmra.mxu0 %v481
  %v653 = vpop.f32.mrf.mxu0
  %v654 = vadd.f32 %v521, %v653
  %v655 = vpop.f32.mrf.mxu0
  %v656 = vadd.f32 %v521, %v655
  %657 = vmatmul.bf16.gmra.mxu0 %v483
  %v658 = vpop.f32.mrf.mxu0
  %v659 = vadd.f32 %v521, %v658
  %v660 = vpop.f32.mrf.mxu0
  %v661 = vadd.f32 %v521, %v660
  %662 = vmatmul.bf16.gmra.mxu0 %v485
  %v663 = vpop.f32.mrf.mxu0
  %v664 = vadd.f32 %v521, %v663
  %v665 = vpop.f32.mrf.mxu0
  %v666 = vadd.f32 %v521, %v665
  %667 = vdwg.mxu0
  %668 = vmatpush.bf16.msra.mxu0 %v602
  %669 = vmatpush.bf16.msra.mxu0 %v601
  %670 = vmatpush.bf16.msra.mxu0 %v600
  %671 = vmatpush.bf16.msra.mxu0 %v599
  %672 = vmatpush.bf16.msra.mxu0 %v598
  %673 = vmatpush.bf16.msra.mxu0 %v597
  %674 = vmatpush.bf16.msra.mxu0 %v596
  %675 = vmatpush.bf16.msra.mxu0 %v595
  %676 = vmatmul.bf16.gmra.mxu0 %v472
  %v677 = vpop.f32.mrf.mxu0
  %v678 = vadd.f32 %v629, %v677
  %v679 = vpop.f32.mrf.mxu0
  %v680 = vadd.f32 %v631, %v679
  %681 = vmatmul.bf16.gmra.mxu0 %v474
  %v682 = vpop.f32.mrf.mxu0
  %v683 = vadd.f32 %v634, %v682
  %v684 = vpop.f32.mrf.mxu0
  %v685 = vadd.f32 %v636, %v684
  %686 = vmatmul.bf16.gmra.mxu0 %v476
  %v687 = vpop.f32.mrf.mxu0
  %v688 = vadd.f32 %v639, %v687
  %v689 = vpop.f32.mrf.mxu0
  %v690 = vadd.f32 %v641, %v689
  %691 = vmatmul.bf16.gmra.mxu0 %v478
  %v692 = vpop.f32.mrf.mxu0
  %v693 = vadd.f32 %v644, %v692
  %v694 = vpop.f32.mrf.mxu0
  %v695 = vadd.f32 %v646, %v694
  %696 = vmatmul.bf16.gmra.mxu0 %v480
  %v697 = vpop.f32.mrf.mxu0
  %v698 = vadd.f32 %v649, %v697
  %v699 = vpop.f32.mrf.mxu0
  %v700 = vadd.f32 %v651, %v699
  %701 = vmatmul.bf16.gmra.mxu0 %v482
  %v702 = vpop.f32.mrf.mxu0
  %v703 = vadd.f32 %v654, %v702
  %v704 = vpop.f32.mrf.mxu0
  %v705 = vadd.f32 %v656, %v704
  %706 = vmatmul.bf16.gmra.mxu0 %v484
  %v707 = vpop.f32.mrf.mxu0
  %v708 = vadd.f32 %v659, %v707
  %v709 = vpop.f32.mrf.mxu0
  %v710 = vadd.f32 %v661, %v709
  %711 = vmatmul.bf16.gmra.mxu0 %v486
  %v712 = vpop.f32.mrf.mxu0
  %v713 = vadd.f32 %v664, %v712
  %v714 = vpop.f32.mrf.mxu0
  %v715 = vadd.f32 %v666, %v714
  %716 = vdwg.mxu0
  %v717 = vmax.f32 %v678, 0.0
  %v718 = vmax.f32 %v680, 0.0
  %v719 = vmax.f32 %v683, 0.0
  %v720 = vmax.f32 %v685, 0.0
  %v721 = vmax.f32 %v688, 0.0
  %v722 = vmax.f32 %v690, 0.0
  %v723 = vmax.f32 %v693, 0.0
  %v724 = vmax.f32 %v695, 0.0
  %v725 = vmax.f32 %v698, 0.0
  %v726 = vmax.f32 %v700, 0.0
  %v727 = vmax.f32 %v703, 0.0
  %v728 = vmax.f32 %v705, 0.0
  %v729 = vmax.f32 %v708, 0.0
  %v730 = vmax.f32 %v710, 0.0
  %v731 = vmax.f32 %v713, 0.0
  %v732 = vmax.f32 %v715, 0.0
  %v733 = vpack.c.bf16 %v718, %v717
  %v734 = vpack.c.bf16 %v720, %v719
  %v735 = vpack.c.bf16 %v722, %v721
  %v736 = vpack.c.bf16 %v724, %v723
  %v737 = vpack.c.bf16 %v726, %v725
  %v738 = vpack.c.bf16 %v728, %v727
  %v739 = vpack.c.bf16 %v730, %v729
  %v740 = vpack.c.bf16 %v732, %v731
  %v741 = vld [vmem:[%s7] sm:$0xf]
  %v742 = vld [vmem:[%s7 + $0x4] sm:$0xf]
  %v743 = vld [vmem:[%s7 + $0x8] sm:$0xf]
  %v744 = vld [vmem:[%s7 + $0xc] sm:$0xf]
  %v745 = vld [vmem:[%s7 + $0x10] sm:$0xf]
  %v746 = vld [vmem:[%s7 + $0x14] sm:$0xf]
  %v747 = vld [vmem:[%s7 + $0x18] sm:$0xf]
  %v748 = vld [vmem:[%s7 + $0x1c] sm:$0xf]
  %v749 = vld [vmem:[%s7 + $0x20] sm:$0xf]
  %v750 = vld [vmem:[%s7 + $0x24] sm:$0xf]
  %v751 = vld [vmem:[%s7 + $0x28] sm:$0xf]
  %v752 = vld [vmem:[%s7 + $0x2c] sm:$0xf]
  %v753 = vld [vmem:[%s7 + $0x30] sm:$0xf]
  %v754 = vld [vmem:[%s7 + $0x34] sm:$0xf]
  %v755 = vld [vmem:[%s7 + $0x38] sm:$0xf]
  %v756 = vld [vmem:[%s7 + $0x3c] sm:$0xf]
  %v757 = vld [vmem:[%s8] sm:$0x1]
  %v759 = vperm.slane %v757, 0
  %v777 = vunpack.c.l.b16 %v741
  %v778 = vunpack.c.l.b16 %v742
  %v779 = vunpack.c.l.b16 %v743
  %v780 = vunpack.c.l.b16 %v744
  %v781 = vunpack.c.l.b16 %v745
  %v782 = vunpack.c.l.b16 %v746
  %v783 = vunpack.c.l.b16 %v747
  %v784 = vunpack.c.l.b16 %v748
  %v785 = vunpack.c.l.b16 %v749
  %v786 = vunpack.c.l.b16 %v750
  %v787 = vunpack.c.l.b16 %v751
  %v788 = vunpack.c.l.b16 %v752
  %v789 = vunpack.c.l.b16 %v753
  %v790 = vunpack.c.l.b16 %v754
  %v791 = vunpack.c.l.b16 %v755
  %v792 = vunpack.c.l.b16 %v756
  %v793 = vpack.c.b16 %v778, %v777
  %v794 = vpack.c.b16 %v780, %v779
  %v795 = vpack.c.b16 %v782, %v781
  %v796 = vpack.c.b16 %v784, %v783
  %v797 = vpack.c.b16 %v786, %v785
  %v798 = vpack.c.b16 %v788, %v787
  %v799 = vpack.c.b16 %v790, %v789
  %v800 = vpack.c.b16 %v792, %v791
  %809 = vmatpush.bf16.msra.mxu0 %v800
  %810 = vmatpush.bf16.msra.mxu0 %v799
  %811 = vmatpush.bf16.msra.mxu0 %v798
  %812 = vmatpush.bf16.msra.mxu0 %v797
  %813 = vmatpush.bf16.msra.mxu0 %v796
  %814 = vmatpush.bf16.msra.mxu0 %v795
  %815 = vmatpush.bf16.msra.mxu0 %v794
  %816 = vmatpush.bf16.msra.mxu0 %v793
  %817 = vmatmul.bf16.gmra.mxu0 %v733
  %v818 = vpop.f32.mrf.mxu0
  %v819 = vadd.f32 %v759, %v818
  %v820 = vpop.f32.mrf.mxu0
  %v821 = vadd.f32 %v759, %v820
  %822 = vmatmul.bf16.gmra.mxu0 %v734
  %v823 = vpop.f32.mrf.mxu0
  %v824 = vadd.f32 %v759, %v823
  %v825 = vpop.f32.mrf.mxu0
  %v826 = vadd.f32 %v759, %v825
  %827 = vmatmul.bf16.gmra.mxu0 %v735
  %v828 = vpop.f32.mrf.mxu0
  %v829 = vadd.f32 %v759, %v828
  %v830 = vpop.f32.mrf.mxu0
  %v831 = vadd.f32 %v759, %v830
  %832 = vmatmul.bf16.gmra.mxu0 %v736
  %v833 = vpop.f32.mrf.mxu0
  %v834 = vadd.f32 %v759, %v833
  %v835 = vpop.f32.mrf.mxu0
  %v836 = vadd.f32 %v759, %v835
  %837 = vmatmul.bf16.gmra.mxu0 %v737
  %v838 = vpop.f32.mrf.mxu0
  %v839 = vadd.f32 %v759, %v838
  %v840 = vpop.f32.mrf.mxu0
  %v841 = vadd.f32 %v759, %v840
  %842 = vmatmul.bf16.gmra.mxu0 %v738
  %v843 = vpop.f32.mrf.mxu0
  %v844 = vadd.f32 %v759, %v843
  %v845 = vpop.f32.mrf.mxu0
  %v846 = vadd.f32 %v759, %v845
  %847 = vmatmul.bf16.gmra.mxu0 %v739
  %v848 = vpop.f32.mrf.mxu0
  %v849 = vadd.f32 %v759, %v848
  %v850 = vpop.f32.mrf.mxu0
  %v851 = vadd.f32 %v759, %v850
  %852 = vmatmul.bf16.gmra.mxu0 %v740
  %v853 = vpop.f32.mrf.mxu0
  %v854 = vadd.f32 %v759, %v853
  %v855 = vpop.f32.mrf.mxu0
  %v856 = vadd.f32 %v759, %v855
  %857 = vdwg.mxu0
  %v858 = vmax.f32 %v819, 0.0
  %v859 = vmax.f32 %v821, 0.0
  %v860 = vmax.f32 %v824, 0.0
  %v861 = vmax.f32 %v826, 0.0
  %v862 = vmax.f32 %v829, 0.0
  %v863 = vmax.f32 %v831, 0.0
  %v864 = vmax.f32 %v834, 0.0
  %v865 = vmax.f32 %v836, 0.0
  %v866 = vmax.f32 %v839, 0.0
  %v867 = vmax.f32 %v841, 0.0
  %v868 = vmax.f32 %v844, 0.0
  %v869 = vmax.f32 %v846, 0.0
  %v870 = vmax.f32 %v849, 0.0
  %v871 = vmax.f32 %v851, 0.0
  %v872 = vmax.f32 %v854, 0.0
  %v873 = vmax.f32 %v856, 0.0
  %v874 = vld [vmem:[%s9] sm:$0x1]
  %v876 = vperm.slane %v874, 0
  %v878 = vmul.f32 %v76, %v876
  %v879 = vmul.f32 %v77, %v876
  %v880 = vmul.f32 %v78, %v876
  %v881 = vmul.f32 %v79, %v876
  %v882 = vmul.f32 %v80, %v876
  %v883 = vmul.f32 %v81, %v876
  %v884 = vmul.f32 %v82, %v876
  %v885 = vmul.f32 %v83, %v876
  %v886 = vmul.f32 %v84, %v876
  %v887 = vmul.f32 %v85, %v876
  %v888 = vmul.f32 %v86, %v876
  %v889 = vmul.f32 %v87, %v876
  %v890 = vmul.f32 %v88, %v876
  %v891 = vmul.f32 %v89, %v876
  %v892 = vmul.f32 %v90, %v876
  %v893 = vmul.f32 %v91, %v876
  %v894 = vsel %vm136, %v878, 0.0
  %895 = vadd.xlane.f32.xlu0 %v894
  %v896 = vpop.xlane.xlu0 %895
  %v897 = vsel %vm136, %v879, 0.0
  %898 = vadd.xlane.f32.xlu0 %v897
  %v899 = vpop.xlane.xlu0 %898
  %v900 = vsel %vm136, %v880, 0.0
  %901 = vadd.xlane.f32.xlu0 %v900
  %v902 = vpop.xlane.xlu0 %901
  %v903 = vsel %vm136, %v881, 0.0
  %904 = vadd.xlane.f32.xlu0 %v903
  %v905 = vpop.xlane.xlu0 %904
  %v906 = vsel %vm136, %v882, 0.0
  %907 = vadd.xlane.f32.xlu0 %v906
  %v908 = vpop.xlane.xlu0 %907
  %v909 = vsel %vm136, %v883, 0.0
  %910 = vadd.xlane.f32.xlu0 %v909
  %v911 = vpop.xlane.xlu0 %910
  %v912 = vsel %vm136, %v884, 0.0
  %913 = vadd.xlane.f32.xlu0 %v912
  %v914 = vpop.xlane.xlu0 %913
  %v915 = vsel %vm136, %v885, 0.0
  %916 = vadd.xlane.f32.xlu0 %v915
  %v917 = vpop.xlane.xlu0 %916
  %v918 = vsel %vm136, %v886, 0.0
  %919 = vadd.xlane.f32.xlu0 %v918
  %v920 = vpop.xlane.xlu0 %919
  %v921 = vsel %vm136, %v887, 0.0
  %922 = vadd.xlane.f32.xlu0 %v921
  %v923 = vpop.xlane.xlu0 %922
  %v924 = vsel %vm136, %v888, 0.0
  %925 = vadd.xlane.f32.xlu0 %v924
  %v926 = vpop.xlane.xlu0 %925
  %v927 = vsel %vm136, %v889, 0.0
  %928 = vadd.xlane.f32.xlu0 %v927
  %v929 = vpop.xlane.xlu0 %928
  %v930 = vsel %vm136, %v890, 0.0
  %931 = vadd.xlane.f32.xlu0 %v930
  %v932 = vpop.xlane.xlu0 %931
  %v933 = vsel %vm136, %v891, 0.0
  %934 = vadd.xlane.f32.xlu0 %v933
  %v935 = vpop.xlane.xlu0 %934
  %v936 = vsel %vm136, %v892, 0.0
  %937 = vadd.xlane.f32.xlu0 %v936
  %v938 = vpop.xlane.xlu0 %937
  %v939 = vsel %vm136, %v893, 0.0
  %940 = vadd.xlane.f32.xlu0 %v939
  %v941 = vpop.xlane.xlu0 %940
  %v942 = vld [vmem:[%s10] sm:$0x1]
  %v944 = vperm.slane %v942, 0
  %v946 = vmul.f32 %v858, %v944
  %v947 = vmul.f32 %v859, %v944
  %v948 = vmul.f32 %v860, %v944
  %v949 = vmul.f32 %v861, %v944
  %v950 = vmul.f32 %v862, %v944
  %v951 = vmul.f32 %v863, %v944
  %v952 = vmul.f32 %v864, %v944
  %v953 = vmul.f32 %v865, %v944
  %v954 = vmul.f32 %v866, %v944
  %v955 = vmul.f32 %v867, %v944
  %v956 = vmul.f32 %v868, %v944
  %v957 = vmul.f32 %v869, %v944
  %v958 = vmul.f32 %v870, %v944
  %v959 = vmul.f32 %v871, %v944
  %v960 = vmul.f32 %v872, %v944
  %v961 = vmul.f32 %v873, %v944
  %vm962 = vcmask 523264
  %v963 = vsel %vm962, %v946, 0.0
  %964 = vadd.xlane.f32.xlu0 %v963
  %v965 = vpop.xlane.xlu0 %964
  %v966 = vsel %vm962, %v947, 0.0
  %967 = vadd.xlane.f32.xlu0 %v966
  %v968 = vpop.xlane.xlu0 %967
  %v969 = vsel %vm962, %v948, 0.0
  %970 = vadd.xlane.f32.xlu0 %v969
  %v971 = vpop.xlane.xlu0 %970
  %v972 = vsel %vm962, %v949, 0.0
  %973 = vadd.xlane.f32.xlu0 %v972
  %v974 = vpop.xlane.xlu0 %973
  %v975 = vsel %vm962, %v950, 0.0
  %976 = vadd.xlane.f32.xlu0 %v975
  %v977 = vpop.xlane.xlu0 %976
  %v978 = vsel %vm962, %v951, 0.0
  %979 = vadd.xlane.f32.xlu0 %v978
  %v980 = vpop.xlane.xlu0 %979
  %v981 = vsel %vm962, %v952, 0.0
  %982 = vadd.xlane.f32.xlu0 %v981
  %v983 = vpop.xlane.xlu0 %982
  %v984 = vsel %vm962, %v953, 0.0
  %985 = vadd.xlane.f32.xlu0 %v984
  %v986 = vpop.xlane.xlu0 %985
  %v987 = vsel %vm962, %v954, 0.0
  %988 = vadd.xlane.f32.xlu0 %v987
  %v989 = vpop.xlane.xlu0 %988
  %v990 = vsel %vm962, %v955, 0.0
  %991 = vadd.xlane.f32.xlu0 %v990
  %v992 = vpop.xlane.xlu0 %991
  %v993 = vsel %vm962, %v956, 0.0
  %994 = vadd.xlane.f32.xlu0 %v993
  %v995 = vpop.xlane.xlu0 %994
  %v996 = vsel %vm962, %v957, 0.0
  %997 = vadd.xlane.f32.xlu0 %v996
  %v998 = vpop.xlane.xlu0 %997
  %v999 = vsel %vm962, %v958, 0.0
  %1000 = vadd.xlane.f32.xlu0 %v999
  %v1001 = vpop.xlane.xlu0 %1000
  %v1002 = vsel %vm962, %v959, 0.0
  %1003 = vadd.xlane.f32.xlu0 %v1002
  %v1004 = vpop.xlane.xlu0 %1003
  %v1005 = vsel %vm962, %v960, 0.0
  %1006 = vadd.xlane.f32.xlu0 %v1005
  %v1007 = vpop.xlane.xlu0 %1006
  %v1008 = vsel %vm962, %v961, 0.0
  %1009 = vadd.xlane.f32.xlu0 %v1008
  %v1010 = vpop.xlane.xlu0 %1009
  %v1011 = vadd.f32 %v896, %v965
  %v1012 = vadd.f32 %v899, %v968
  %v1013 = vadd.f32 %v902, %v971
  %v1014 = vadd.f32 %v905, %v974
  %v1015 = vadd.f32 %v908, %v977
  %v1016 = vadd.f32 %v911, %v980
  %v1017 = vadd.f32 %v914, %v983
  %v1018 = vadd.f32 %v917, %v986
  %v1019 = vadd.f32 %v920, %v989
  %v1020 = vadd.f32 %v923, %v992
  %v1021 = vadd.f32 %v926, %v995
  %v1022 = vadd.f32 %v929, %v998
  %v1023 = vadd.f32 %v932, %v1001
  %v1024 = vadd.f32 %v935, %v1004
  %v1025 = vadd.f32 %v938, %v1007
  %v1026 = vadd.f32 %v941, %v1010
  %v1027 = vld [vmem:[#allocation2] sm:$0x1]
  %v1029 = vperm.slane %v1027, 0
  %v1031 = vadd.f32 %v1011, %v1029
  %v1032 = vadd.f32 %v1012, %v1029
  %v1033 = vadd.f32 %v1013, %v1029
  %v1034 = vadd.f32 %v1014, %v1029
  %v1035 = vadd.f32 %v1015, %v1029
  %v1036 = vadd.f32 %v1016, %v1029
  %v1037 = vadd.f32 %v1017, %v1029
  %v1038 = vadd.f32 %v1018, %v1029
  %v1039 = vadd.f32 %v1019, %v1029
  %v1040 = vadd.f32 %v1020, %v1029
  %v1041 = vadd.f32 %v1021, %v1029
  %v1042 = vadd.f32 %v1022, %v1029
  %v1043 = vadd.f32 %v1023, %v1029
  %v1044 = vadd.f32 %v1024, %v1029
  %v1045 = vadd.f32 %v1025, %v1029
  %v1046 = vadd.f32 %v1026, %v1029
  %v1047 = vsub.f32 0.0, %v1031
  %v1048 = vsub.f32 0.0, %v1032
  %v1049 = vsub.f32 0.0, %v1033
  %v1050 = vsub.f32 0.0, %v1034
  %v1051 = vsub.f32 0.0, %v1035
  %v1052 = vsub.f32 0.0, %v1036
  %v1053 = vsub.f32 0.0, %v1037
  %v1054 = vsub.f32 0.0, %v1038
  %v1055 = vsub.f32 0.0, %v1039
  %v1056 = vsub.f32 0.0, %v1040
  %v1057 = vsub.f32 0.0, %v1041
  %v1058 = vsub.f32 0.0, %v1042
  %v1059 = vsub.f32 0.0, %v1043
  %v1060 = vsub.f32 0.0, %v1044
  %v1061 = vsub.f32 0.0, %v1045
  %v1062 = vsub.f32 0.0, %v1046
  %v1063 = vmul.f32 %v1047, 1.442695
  %v1064 = vpow.pop %v1063
  %v1065 = vmul.f32 %v1048, 1.442695
  %v1066 = vpow.pop %v1065
  %v1067 = vmul.f32 %v1049, 1.442695
  %v1068 = vpow.pop %v1067
  %v1069 = vmul.f32 %v1050, 1.442695
  %v1070 = vpow.pop %v1069
  %v1071 = vmul.f32 %v1051, 1.442695
  %v1072 = vpow.pop %v1071
  %v1073 = vmul.f32 %v1052, 1.442695
  %v1074 = vpow.pop %v1073
  %v1075 = vmul.f32 %v1053, 1.442695
  %v1076 = vpow.pop %v1075
  %v1077 = vmul.f32 %v1054, 1.442695
  %v1078 = vpow.pop %v1077
  %v1079 = vmul.f32 %v1055, 1.442695
  %v1080 = vpow.pop %v1079
  %v1081 = vmul.f32 %v1056, 1.442695
  %v1082 = vpow.pop %v1081
  %v1083 = vmul.f32 %v1057, 1.442695
  %v1084 = vpow.pop %v1083
  %v1085 = vmul.f32 %v1058, 1.442695
  %v1086 = vpow.pop %v1085
  %v1087 = vmul.f32 %v1059, 1.442695
  %v1088 = vpow.pop %v1087
  %v1089 = vmul.f32 %v1060, 1.442695
  %v1090 = vpow.pop %v1089
  %v1091 = vmul.f32 %v1061, 1.442695
  %v1092 = vpow.pop %v1091
  %v1093 = vmul.f32 %v1062, 1.442695
  %v1094 = vpow.pop %v1093
  %v1095 = vadd.f32 %v1064, 1.0
  %v1096 = vadd.f32 %v1066, 1.0
  %v1097 = vadd.f32 %v1068, 1.0
  %v1098 = vadd.f32 %v1070, 1.0
  %v1099 = vadd.f32 %v1072, 1.0
  %v1100 = vadd.f32 %v1074, 1.0
  %v1101 = vadd.f32 %v1076, 1.0
  %v1102 = vadd.f32 %v1078, 1.0
  %v1103 = vadd.f32 %v1080, 1.0
  %v1104 = vadd.f32 %v1082, 1.0
  %v1105 = vadd.f32 %v1084, 1.0
  %v1106 = vadd.f32 %v1086, 1.0
  %v1107 = vadd.f32 %v1088, 1.0
  %v1108 = vadd.f32 %v1090, 1.0
  %v1109 = vadd.f32 %v1092, 1.0
  %v1110 = vadd.f32 %v1094, 1.0
  %v1111 = vrcp.pop %v1095
  %v1112 = vrcp.pop %v1096
  %v1113 = vrcp.pop %v1097
  %v1114 = vrcp.pop %v1098
  %v1115 = vrcp.pop %v1099
  %v1116 = vrcp.pop %v1100
  %v1117 = vrcp.pop %v1101
  %v1118 = vrcp.pop %v1102
  %v1119 = vrcp.pop %v1103
  %v1120 = vrcp.pop %v1104
  %v1121 = vrcp.pop %v1105
  %v1122 = vrcp.pop %v1106
  %v1123 = vrcp.pop %v1107
  %v1124 = vrcp.pop %v1108
  %v1125 = vrcp.pop %v1109
  %v1126 = vrcp.pop %v1110
  %vm1127 = vcmask 7168
  %1128 = vst.msk [vmem:[%s12] sm:$0xff] %vm1127, %v1111
  %1129 = vst.msk [vmem:[%s12 + $0x8] sm:$0xff] %vm1127, %v1112
  %1130 = vst.msk [vmem:[%s12 + $0x10] sm:$0xff] %vm1127, %v1113
  %1131 = vst.msk [vmem:[%s12 + $0x18] sm:$0xff] %vm1127, %v1114
  %1132 = vst.msk [vmem:[%s12 + $0x20] sm:$0xff] %vm1127, %v1115
  %1133 = vst.msk [vmem:[%s12 + $0x28] sm:$0xff] %vm1127, %v1116
  %1134 = vst.msk [vmem:[%s12 + $0x30] sm:$0xff] %vm1127, %v1117
  %1135 = vst.msk [vmem:[%s12 + $0x38] sm:$0xff] %vm1127, %v1118
  %1136 = vst.msk [vmem:[%s12 + $0x40] sm:$0xff] %vm1127, %v1119
  %1137 = vst.msk [vmem:[%s12 + $0x48] sm:$0xff] %vm1127, %v1120
  %1138 = vst.msk [vmem:[%s12 + $0x50] sm:$0xff] %vm1127, %v1121
  %1139 = vst.msk [vmem:[%s12 + $0x58] sm:$0xff] %vm1127, %v1122
  %1140 = vst.msk [vmem:[%s12 + $0x60] sm:$0xff] %vm1127, %v1123
  %1141 = vst.msk [vmem:[%s12 + $0x68] sm:$0xff] %vm1127, %v1124
  %1142 = vst.msk [vmem:[%s12 + $0x70] sm:$0xff] %vm1127, %v1125
  %1143 = vst.msk [vmem:[%s12 + $0x78] sm:$0xff] %vm1127, %v1126
  // Predicated region
  $region50: #{tpu_custom_call.1} parent=0 // pred_check
    _
  $region51: #{tpu_custom_call.1} parent=0 // pred_check_branch
    %1145 = sbr.rel (0) target = $region53
  $region52: #{tpu_custom_call.1} parent=0 // pred_region
    _
  $region53: #{tpu_custom_call.1} parent=0 // pred_fallthru
    _
  // Predicated region
  $region54: #{tpu_custom_call.1} parent=0 // pred_check
    _
  $region55: #{tpu_custom_call.1} parent=0 // pred_check_branch
    %1147 = sbr.rel (0) target = $region57
  $region56: #{tpu_custom_call.1} parent=0 // pred_region
    _
  $region57: #{tpu_custom_call.1} parent=0 // pred_fallthru
    _

</llo_original>
